<compile_context>
chip_gen: v5e
topology: v5e:2x2
jax: 0.10.0
libtpu: 0.0.40
codegen_flags: <defaults>
</compile_context>

<pallas_src>
import math

import jax
import jax.numpy as jnp
from jax.experimental import pallas as pl
from jax.experimental.pallas import tpu as pltpu

LANE = 128


def _round_up(v, m):
    return (v + m - 1) // m * m


def _vmem_budget_bytes():
    """Per-generation usable VMEM budget (with headroom).

    v5e/v6e have 128 MiB physical -> allow ~100 MiB; v7x has 64 MiB -> ~54 MiB.
    Falls back to the conservative 64 MiB figure if the trace-time query is unavailable.
    """
    cap = 64 * 1024 * 1024
    try:
        info = pltpu.get_tpu_info()
        cap = int(getattr(info, "vmem_capacity_bytes", cap) or cap)
    except Exception:
        pass
    if cap >= 128 * 1024 * 1024:
        return 100 * 1024 * 1024
    return int(cap * 0.85)


def make_mlp_kernel(num_layers, compute_dtype):
    """Fused kernel: all layers computed on one row-tile, intermediates stay on-chip.

    Weights are in `compute_dtype` (f32 or bf16); biases are kept in f32 so the bias-add and
    ReLU run in f32 (also required on v5e, which has no bf16 VPU).  The f32 result is re-cast
    to `compute_dtype` before feeding the next layer's MXU matmul.
    """

    def kernel(*refs):
        x_ref = refs[0]
        o_ref = refs[-1]
        params = refs[1:-1]  # (w0, b0, w1, b1, ...) -- weights compute_dtype, biases f32
        h = x_ref[...]
        for l in range(num_layers):
            w = params[2 * l][...]
            b = params[2 * l + 1][...]
            acc = jnp.dot(h.astype(compute_dtype), w,
                          preferred_element_type=jnp.float32) + b
            if l != num_layers - 1:
                acc = jnp.maximum(acc, 0.0)          # ReLU between hidden layers (f32)
                h = acc.astype(compute_dtype)        # narrow LHS for the next matmul
            else:
                h = acc
        o_ref[...] = h.astype(o_ref.dtype)

    return kernel


def _choose_tile_n(N, pdims, compute_dtype, out_dtype, weight_bytes, vmem_budget,
                   min_steps=4, max_tile=1024):
    """Row tile: as large as the VMEM budget allows (after resident weights), capped at 1024
    rows (diminishing returns past ~512-1024), and small enough to yield >= min_steps grid
    steps so both v7x TensorCores get >= 2 iterations each."""
    sublane = 16 if jnp.dtype(compute_dtype).itemsize == 2 else 8
    in_bytes = jnp.dtype(compute_dtype).itemsize
    out_bytes = jnp.dtype(out_dtype).itemsize
    acc_bytes = 4  # f32 intermediates
    # Per-row VMEM: double-buffered input/output tiles + the widest live f32 intermediates.
    per_row = (2 * pdims[0] * in_bytes
               + 2 * pdims[-1] * out_bytes
               + 2 * max(pdims) * acc_bytes)
    avail = max(vmem_budget - weight_bytes, per_row * sublane)
    cap = max(sublane, (avail // per_row) // sublane * sublane)
    want = _round_up(max(1, -(-N // min_steps)), sublane)
    tile = min(max_tile, cap, want)
    return max(sublane, tile // sublane * sublane)


def mlp_pallas(x, weights, biases, *, compute_dtype=jnp.float32, out_dtype=None, tile_n=None):
    """x: (N, dim_in); weights[l]: (in_l, out_l); biases[l]: (1, out_l)."""
    num_layers = len(weights)
    N, dim_in = x.shape
    dim_out = weights[-1].shape[1]
    compute_dtype = jnp.dtype(compute_dtype)
    out_dtype = jnp.dtype(x.dtype) if out_dtype is None else jnp.dtype(out_dtype)

    # Lane-pad every feature dimension to a multiple of 128 (exactly 128-aligned also maps
    # cleanly onto v5e's 4x128x128 MXU; no extra 256-alignment).
    dims = [dim_in] + [w.shape[1] for w in weights]
    pdims = [_round_up(d, LANE) for d in dims]

    w_itemsize = compute_dtype.itemsize
    sublane = 16 if w_itemsize == 2 else 8

    # Resident parameter bytes: weights in compute_dtype, biases in f32, single-buffered.
    weight_bytes = sum(pdims[l] * pdims[l + 1] * w_itemsize + pdims[l + 1] * 4
                       for l in range(num_layers))

    vmem_budget = _vmem_budget_bytes()
    if weight_bytes > int(vmem_budget * 0.75):
        # TODO(synk): for MLPs whose resident weights exceed VMEM (threshold ~40 MiB on v7x,
        # ~90 MiB on v5e/v6e), tile the feature (K/N) dims with an extra "arbitrary" grid axis
        # (accumulator + pl.when init/finalize) or pltpu.emit_pipeline over weight chunks.
        raise ValueError(
            f"Resident padded weights ({weight_bytes} B) exceed the VMEM budget "
            f"({vmem_budget} B); feature-dimension tiling is not implemented.")

    if tile_n is None:
        tile_n = _choose_tile_n(N, pdims, compute_dtype, out_dtype, weight_bytes, vmem_budget)
    else:
        tile_n = max(sublane, _round_up(int(tile_n), sublane))

    num_steps = -(-N // tile_n)
    if num_steps > 1 and num_steps % 2 == 1:
        num_steps += 1  # even step count: neither v7x TensorCore sits idle on the last step
    Np = num_steps * tile_n

    # Pad + pre-cast inputs and parameters in the wrapper (outside the kernel).
    xp = jnp.pad(x.astype(compute_dtype), ((0, Np - N), (0, pdims[0] - dim_in)))
    args = [xp]
    in_specs = [pl.BlockSpec((tile_n, pdims[0]), lambda i: (i, 0))]
    resident = pl.Buffered(1)  # constant index_map -> no double-buffering needed
    for l, (w, b) in enumerate(zip(weights, biases)):
        wp = jnp.pad(w.astype(compute_dtype),
                     ((0, pdims[l] - w.shape[0]), (0, pdims[l + 1] - w.shape[1])))
        bp = jnp.pad(b.astype(jnp.float32).reshape(1, -1),
                     ((0, 0), (0, pdims[l + 1] - b.shape[-1])))
        in_specs.append(pl.BlockSpec(wp.shape, lambda i: (0, 0), pipeline_mode=resident))
        in_specs.append(pl.BlockSpec(bp.shape, lambda i: (0, 0), pipeline_mode=resident))
        args.append(wp)
        args.append(bp)

    out_spec = pl.BlockSpec((tile_n, pdims[-1]), lambda i: (i, 0))

    # VMEM limit derived from the real footprint, capped at the per-generation budget.
    io_bytes = (2 * tile_n * pdims[0] * w_itemsize
                + 2 * tile_n * pdims[-1] * out_dtype.itemsize)
    interm_bytes = 2 * tile_n * max(pdims) * 4
    footprint = weight_bytes + io_bytes + interm_bytes
    vmem_limit = int(min(vmem_budget, max(2 * footprint, 16 * 1024 * 1024)))

    flops = 2 * Np * sum(pdims[l] * pdims[l + 1] for l in range(num_layers))
    bytes_accessed = (xp.size * w_itemsize
                      + sum(a.size * a.dtype.itemsize for a in args[1:])
                      + Np * pdims[-1] * out_dtype.itemsize)
    cost = pl.CostEstimate(flops=flops, transcendentals=0, bytes_accessed=bytes_accessed)

    out_padded = pl.pallas_call(
        make_mlp_kernel(num_layers, compute_dtype),
        out_shape=jax.ShapeDtypeStruct((Np, pdims[-1]), out_dtype),
        grid_spec=pltpu.PrefetchScalarGridSpec(
            num_scalar_prefetch=0,
            grid=(num_steps,),
            in_specs=in_specs,
            out_specs=out_spec,
        ),
        compiler_params=pltpu.CompilerParams(
            dimension_semantics=("parallel",),
            vmem_limit_bytes=vmem_limit,
        ),
        cost_estimate=cost,
    )(*args)

    return out_padded[:N, :dim_out]


def init_mlp_params(key, dim_in, dim_out, dim_hidden, num_layers):
    """Deterministic init mimicking PyTorch nn.Linear (uniform +/- 1/sqrt(fan_in))."""
    weights, biases = [], []
    for l in range(num_layers):
        d_in = dim_in if l == 0 else dim_hidden
        d_out = dim_out if l == num_layers - 1 else dim_hidden
        key, kw, kb = jax.random.split(key, 3)
        bound = 1.0 / math.sqrt(d_in)
        # store as (in, out) == PyTorch weight.T
        w = jax.random.uniform(kw, (d_in, d_out), jnp.float32, -bound, bound)
        b = jax.random.uniform(kb, (1, d_out), jnp.float32, -bound, bound)
        weights.append(w)
        biases.append(b)
    return weights, biases


def mlp_reference(x, weights, biases):
    num_layers = len(weights)
    h = x
    for l in range(num_layers):
        h = h @ weights[l] + biases[l]
        if l != num_layers - 1:
            h = jnp.maximum(h, 0.0)
    return h


if __name__ == "__main__":
    # Small shapes consistent with MLP(dim_in, dim_out, dim_hidden, num_layers)
    dim_in, dim_out, dim_hidden, num_layers = 32, 16, 64, 3
    N = 256  # number of input rows (e.g. sampled points)

    key = jax.random.PRNGKey(0)
    key, kx = jax.random.split(key)
    x = jax.random.normal(kx, (N, dim_in), dtype=jnp.float32)

    weights, biases = init_mlp_params(key, dim_in, dim_out, dim_hidden, num_layers)

    ref = mlp_reference(x, weights, biases)

    # f32 path (default): tight tolerance vs the pure-JAX reference.
    out = mlp_pallas(x, weights, biases)
    out = jax.block_until_ready(out)
    assert out.shape == (N, dim_out)
    assert jnp.allclose(out, ref, atol=1e-4, rtol=1e-4), "Pallas MLP (f32) mismatch vs reference"

    # bf16 compute path (f32 accumulation, f32 output): loose tolerance.
    out_bf16 = mlp_pallas(x, weights, biases, compute_dtype=jnp.bfloat16)
    out_bf16 = jax.block_until_ready(out_bf16)
    assert out_bf16.shape == (N, dim_out)
    assert bool(jnp.all(jnp.isfinite(out_bf16)))
    assert jnp.allclose(out_bf16.astype(jnp.float32), ref, atol=1.5e-1, rtol=1.5e-1), \
        "Pallas MLP (bf16) mismatch vs reference"

    print("KERNEL_OK")
</pallas_src>

<mosaic_0001>
module attributes {stable_mosaic.version = 11 : i64} {
  func.func @kernel(%arg0: i32, %arg1: memref<64x128xf32, #tpu.memory_space<vmem>>, %arg2: memref<128x128xf32, #tpu.memory_space<vmem>>, %arg3: memref<1x128xf32, #tpu.memory_space<vmem>>, %arg4: memref<128x128xf32, #tpu.memory_space<vmem>>, %arg5: memref<1x128xf32, #tpu.memory_space<vmem>>, %arg6: memref<128x128xf32, #tpu.memory_space<vmem>>, %arg7: memref<1x128xf32, #tpu.memory_space<vmem>>, %arg8: memref<64x128xf32, #tpu.memory_space<vmem>>) attributes {dimension_semantics = [#tpu.dimension_semantics<parallel>], iteration_bounds = array<i64: 4>, scalar_prefetch = 0 : i64, scratch_operands = 0 : i64, tpu.core_type = #tpu.core_type<tc>, window_params = [{transform_indices = @transform_0, window_bounds = array<i64: 64, 128>}, {pipeline_mode = #tpu.pipeline_mode<synchronous>, transform_indices = @transform_1, window_bounds = array<i64: 128, 128>}, {pipeline_mode = #tpu.pipeline_mode<synchronous>, transform_indices = @transform_2, window_bounds = array<i64: 1, 128>}, {pipeline_mode = #tpu.pipeline_mode<synchronous>, transform_indices = @transform_3, window_bounds = array<i64: 128, 128>}, {pipeline_mode = #tpu.pipeline_mode<synchronous>, transform_indices = @transform_4, window_bounds = array<i64: 1, 128>}, {pipeline_mode = #tpu.pipeline_mode<synchronous>, transform_indices = @transform_5, window_bounds = array<i64: 128, 128>}, {pipeline_mode = #tpu.pipeline_mode<synchronous>, transform_indices = @transform_6, window_bounds = array<i64: 1, 128>}, {transform_indices = @transform_7, window_bounds = array<i64: 64, 128>}]} {
    %c0 = arith.constant 0 : index
    %c0_0 = arith.constant 0 : index
    %0 = vector.load %arg1[%c0, %c0_0] : memref<64x128xf32, #tpu.memory_space<vmem>>, vector<64x128xf32>
    %c0_1 = arith.constant 0 : index
    %c0_2 = arith.constant 0 : index
    %1 = vector.load %arg2[%c0_1, %c0_2] : memref<128x128xf32, #tpu.memory_space<vmem>>, vector<128x128xf32>
    %c0_3 = arith.constant 0 : index
    %c0_4 = arith.constant 0 : index
    %2 = vector.load %arg3[%c0_3, %c0_4] : memref<1x128xf32, #tpu.memory_space<vmem>>, vector<1x128xf32>
    %cst = arith.constant dense<0.000000e+00> : vector<64x128xf32>
    %3 = tpu.matmul %0, %1, %cst {dimension_numbers = #tpu.dot_dimension_numbers<[1], [0], [0], [1], [0, 0, 1, 1], [], []>} : vector<64x128xf32>, vector<128x128xf32>, vector<64x128xf32> -> vector<64x128xf32>
    %4 = vector.broadcast %2 : vector<1x128xf32> to vector<64x128xf32>
    %5 = arith.addf %3, %4 : vector<64x128xf32>
    %cst_5 = arith.constant 0.000000e+00 : f32
    %6 = vector.broadcast %cst_5 : f32 to vector<64x128xf32>
    %7 = arith.maximumf %5, %6 : vector<64x128xf32>
    %c0_6 = arith.constant 0 : index
    %c0_7 = arith.constant 0 : index
    %8 = vector.load %arg4[%c0_6, %c0_7] : memref<128x128xf32, #tpu.memory_space<vmem>>, vector<128x128xf32>
    %c0_8 = arith.constant 0 : index
    %c0_9 = arith.constant 0 : index
    %9 = vector.load %arg5[%c0_8, %c0_9] : memref<1x128xf32, #tpu.memory_space<vmem>>, vector<1x128xf32>
    %cst_10 = arith.constant dense<0.000000e+00> : vector<64x128xf32>
    %10 = tpu.matmul %7, %8, %cst_10 {dimension_numbers = #tpu.dot_dimension_numbers<[1], [0], [0], [1], [0, 0, 1, 1], [], []>} : vector<64x128xf32>, vector<128x128xf32>, vector<64x128xf32> -> vector<64x128xf32>
    %11 = vector.broadcast %9 : vector<1x128xf32> to vector<64x128xf32>
    %12 = arith.addf %10, %11 : vector<64x128xf32>
    %cst_11 = arith.constant 0.000000e+00 : f32
    %13 = vector.broadcast %cst_11 : f32 to vector<64x128xf32>
    %14 = arith.maximumf %12, %13 : vector<64x128xf32>
    %c0_12 = arith.constant 0 : index
    %c0_13 = arith.constant 0 : index
    %15 = vector.load %arg6[%c0_12, %c0_13] : memref<128x128xf32, #tpu.memory_space<vmem>>, vector<128x128xf32>
    %c0_14 = arith.constant 0 : index
    %c0_15 = arith.constant 0 : index
    %16 = vector.load %arg7[%c0_14, %c0_15] : memref<1x128xf32, #tpu.memory_space<vmem>>, vector<1x128xf32>
    %cst_16 = arith.constant dense<0.000000e+00> : vector<64x128xf32>
    %17 = tpu.matmul %14, %15, %cst_16 {dimension_numbers = #tpu.dot_dimension_numbers<[1], [0], [0], [1], [0, 0, 1, 1], [], []>} : vector<64x128xf32>, vector<128x128xf32>, vector<64x128xf32> -> vector<64x128xf32>
    %18 = vector.broadcast %16 : vector<1x128xf32> to vector<64x128xf32>
    %19 = arith.addf %17, %18 : vector<64x128xf32>
    %c0_17 = arith.constant 0 : index
    %c0_18 = arith.constant 0 : index
    %20 = vector.load %arg8[%c0_17, %c0_18] : memref<64x128xf32, #tpu.memory_space<vmem>>, vector<64x128xf32>
    tpu.vector_store %arg8[%c0_17, %c0_18], %19 {strides = array<i32>} : memref<64x128xf32, #tpu.memory_space<vmem>>, vector<64x128xf32>,
    return
  }
  func.func @transform_0(%arg0: i32) -> (i32, i32) {
    %c0_i32 = arith.constant 0 : i32
    %c0_i32_0 = arith.constant 0 : i32
    return %arg0, %c0_i32 : i32, i32
  }
  func.func @transform_1(%arg0: i32) -> (i32, i32) {
    %c0_i32 = arith.constant 0 : i32
    %c0_i32_0 = arith.constant 0 : i32
    %c0_i32_1 = arith.constant 0 : i32
    return %c0_i32, %c0_i32_0 : i32, i32
  }
  func.func @transform_2(%arg0: i32) -> (i32, i32) {
    %c0_i32 = arith.constant 0 : i32
    %c0_i32_0 = arith.constant 0 : i32
    %c0_i32_1 = arith.constant 0 : i32
    return %c0_i32, %c0_i32_0 : i32, i32
  }
  func.func @transform_3(%arg0: i32) -> (i32, i32) {
    %c0_i32 = arith.constant 0 : i32
    %c0_i32_0 = arith.constant 0 : i32
    %c0_i32_1 = arith.constant 0 : i32
    return %c0_i32, %c0_i32_0 : i32, i32
  }
  func.func @transform_4(%arg0: i32) -> (i32, i32) {
    %c0_i32 = arith.constant 0 : i32
    %c0_i32_0 = arith.constant 0 : i32
    %c0_i32_1 = arith.constant 0 : i32
    return %c0_i32, %c0_i32_0 : i32, i32
  }
  func.func @transform_5(%arg0: i32) -> (i32, i32) {
    %c0_i32 = arith.constant 0 : i32
    %c0_i32_0 = arith.constant 0 : i32
    %c0_i32_1 = arith.constant 0 : i32
    return %c0_i32, %c0_i32_0 : i32, i32
  }
  func.func @transform_6(%arg0: i32) -> (i32, i32) {
    %c0_i32 = arith.constant 0 : i32
    %c0_i32_0 = arith.constant 0 : i32
    %c0_i32_1 = arith.constant 0 : i32
    return %c0_i32, %c0_i32_0 : i32, i32
  }
  func.func @transform_7(%arg0: i32) -> (i32, i32) {
    %c0_i32 = arith.constant 0 : i32
    %c0_i32_0 = arith.constant 0 : i32
    return %arg0, %c0_i32 : i32, i32
  }
}

</mosaic_0001>

<llo_original>
// kernel: tpu_custom_call.1
$region0: #{tpu_custom_call.1}
  #allocation0 [shape = 'u32[]', space=smem, size = 0x4, offset = 0x4, fixed_abs, tag = 'smem constant byte address 0x4 - core index']
  #allocation1 [shape = 'u32[72,128]{1,0:T(1,128)}', space=vmem, size = 0x9000, scoped, tag = 'internal scratch']
  %s0 = inlined_call_operand.hbm [shape: f32[256,128], index: 0, kind: input, shape index: {}]
  %s1 = inlined_call_operand.hbm [shape: f32[128,128], index: 1, kind: input, shape index: {}]
  %s2 = inlined_call_operand.vmem [shape: f32[1,128], index: 2, kind: input, shape index: {}]
  %s3 = inlined_call_operand.hbm [shape: f32[128,128], index: 3, kind: input, shape index: {}]
  %s4 = inlined_call_operand.vmem [shape: f32[1,128], index: 4, kind: input, shape index: {}]
  %s5 = inlined_call_operand.hbm [shape: f32[128,128], index: 5, kind: input, shape index: {}]
  %s6 = inlined_call_operand.vmem [shape: f32[1,128], index: 6, kind: input, shape index: {}]
  %s7 = inlined_call_operand.hbm [shape: f32[256,128], index: 7, kind: output, shape index: {}]
  %s8 = sld [smem:[#allocation0]]
  $region77: #{tpu_custom_call.1} parent=0
    _
  %s10 = ssub.s32 1, %s8
  %s11 = scalar_select 0, %s10, %s8
  $region1: #{tpu_custom_call.1} parent=0
    #allocation2 [shape = 'u8[65536]{0}', space=vmem, size = 0x10000, scoped, tag = 'input window, operand 0']
    #allocation3 [shape = 's32[2]{0}', space=sflag, size = 0x8, scoped, tag = 'scoped memory for tpu_custom_call.1']
    #allocation4 [shape = 's32[2]{0}', space=sflag, size = 0x8, scoped, tag = 'scoped memory for tpu_custom_call.1']
    #allocation5 [shape = 'u8[65536]{0}', space=vmem, size = 0x10000, scoped, tag = 'input window, operand 1, single buffered']
    #allocation6 [shape = 's32[1]{0}', space=sflag, size = 0x4, scoped, tag = 'scoped memory for tpu_custom_call.1']
    #allocation7 [shape = 'u8[65536]{0}', space=vmem, size = 0x10000, scoped, tag = 'input window, operand 3, single buffered']
    #allocation8 [shape = 'u8[65536]{0}', space=vmem, size = 0x10000, scoped, tag = 'input window, operand 5, single buffered']
    #allocation9 [shape = 's32[1]{0}', space=sflag, size = 0x4, scoped, tag = 'scoped memory for tpu_custom_call.1']
    #allocation10 [shape = 'u8[65536]{0}', space=vmem, size = 0x10000, scoped, tag = 'output window, operand 0']
    %12 = vsyncpa [#allocation3], 0
    %s13 = scalar_lea.sflag [#allocation3], 1
    %14 = vsyncpa %s13, 0
    %15 = vsyncpa [#allocation6], 0
    %16 = vsyncpa [#allocation9], 0
    %17 = vsyncpa [#allocation4], 0
    %s18 = scalar_lea.sflag [#allocation4], 1
    %19 = vsyncpa %s18, 0
    loop: start=0, step=1, limit=6
    $region2: #{tpu_custom_call.1} parent=1 // loop_pre_header
      _
    $region3: #{tpu_custom_call.1} parent=1 // loop_header
      %s21 = sphi 0, %s25
      %p22 = scmp.ge.s32.totalorder %s21, 6
      %s31 = sphi 0, %s33
      %s34 = sphi 0, %s31
      %s35 = sphi 0, %s34
      %s51 = sphi 0, %s35
      %s55 = sphi 0, %s55
      %s57 = sphi 0, %s55
      %s58 = sphi 0, %s57
      %s72 = sphi 0, %s58
      %s76 = sphi 0, %s76
      %s78 = sphi 0, %s76
      %s79 = sphi 0, %s78
      %s93 = sphi 0, %s79
      %s97 = sphi 0, %s97
      %s99 = sphi 0, %s97
      %s100 = sphi 0, %s99
      %s114 = sphi 0, %s100
      %s118 = sphi 0, %s118
      %s120 = sphi 0, %s118
      %s121 = sphi 0, %s120
      %s135 = sphi 0, %s121
      %s139 = sphi 0, %s139
      %s141 = sphi 0, %s139
      %s142 = sphi 0, %s141
      %s156 = sphi 0, %s142
      %s160 = sphi 0, %s160
      %s162 = sphi 0, %s160
      %s163 = sphi 0, %s162
      %s177 = sphi 0, %s163
      %s183 = sphi 0, %s185
      %s186 = sphi 0, %s183
      %s187 = sphi 0, %s186
      %s203 = sphi 0, %s187
    $region4: #{tpu_custom_call.1} parent=1 // loop_header_branch
      %24 = sbr.rel (%p22) target = $region8
    $region5: #{tpu_custom_call.1} parent=1 // loop_body
      %s26 = ssub.s32 %s21, 1
      %s27 = ssub.s32 %s21, 2
      %s28 = sadd.s32 %s21, 1
      %s29 = ssub.s32 %s21, %s28
      %p30 = scmp.eq.s32.totalorder %s29, 0
      %s32 = sadd.s32 %s31, 1
      %s33 = scalar_select %p30, %s31, %s32
      %p36 = pneg %p30
      %p37 = scmp.eq.s32.totalorder %s21, 3
      %p38 = por %p36, %p37
      %p39 = scmp.ne.s32.totalorder %s31, %s34
      %p40 = scmp.eq.s32.totalorder %s21, 0
      %p41 = por %p39, %p40
      %p42 = scmp.ne.s32.totalorder %s31, %s34
      %p43 = scmp.eq.s32.totalorder %s26, 3
      %p44 = por %p42, %p43
      %p45 = scmp.ne.s32.totalorder %s34, %s35
      %p46 = scmp.eq.s32.totalorder %s26, 0
      %p47 = por %p45, %p46
      %p48 = scmp.ne.s32.totalorder %s34, %s35
      %p49 = scmp.eq.s32.totalorder %s27, 3
      %p50 = por %p48, %p49
      %p52 = scmp.ne.s32.totalorder %s35, %s51
      %p53 = scmp.eq.s32.totalorder %s27, 0
      %p54 = por %p52, %p53
      %s56 = sadd.s32 %s55, 1
      %p59 = scmp.eq.s32.totalorder %s21, 3
      %p60 = scmp.ne.s32.totalorder %s55, %s57
      %p61 = scmp.eq.s32.totalorder %s21, 0
      %p62 = por %p60, %p61
      %p63 = scmp.ne.s32.totalorder %s55, %s57
      %p64 = scmp.eq.s32.totalorder %s26, 3
      %p65 = por %p63, %p64
      %p66 = scmp.ne.s32.totalorder %s57, %s58
      %p67 = scmp.eq.s32.totalorder %s26, 0
      %p68 = por %p66, %p67
      %p69 = scmp.ne.s32.totalorder %s57, %s58
      %p70 = scmp.eq.s32.totalorder %s27, 3
      %p71 = por %p69, %p70
      %p73 = scmp.ne.s32.totalorder %s58, %s72
      %p74 = scmp.eq.s32.totalorder %s27, 0
      %p75 = por %p73, %p74
      %s77 = sadd.s32 %s76, 1
      %p80 = scmp.eq.s32.totalorder %s21, 3
      %p81 = scmp.ne.s32.totalorder %s76, %s78
      %p82 = scmp.eq.s32.totalorder %s21, 0
      %p83 = por %p81, %p82
      %p84 = scmp.ne.s32.totalorder %s76, %s78
      %p85 = scmp.eq.s32.totalorder %s26, 3
      %p86 = por %p84, %p85
      %p87 = scmp.ne.s32.totalorder %s78, %s79
      %p88 = scmp.eq.s32.totalorder %s26, 0
      %p89 = por %p87, %p88
      %p90 = scmp.ne.s32.totalorder %s78, %s79
      %p91 = scmp.eq.s32.totalorder %s27, 3
      %p92 = por %p90, %p91
      %p94 = scmp.ne.s32.totalorder %s79, %s93
      %p95 = scmp.eq.s32.totalorder %s27, 0
      %p96 = por %p94, %p95
      %s98 = sadd.s32 %s97, 1
      %p101 = scmp.eq.s32.totalorder %s21, 3
      %p102 = scmp.ne.s32.totalorder %s97, %s99
      %p103 = scmp.eq.s32.totalorder %s21, 0
      %p104 = por %p102, %p103
      %p105 = scmp.ne.s32.totalorder %s97, %s99
      %p106 = scmp.eq.s32.totalorder %s26, 3
      %p107 = por %p105, %p106
      %p108 = scmp.ne.s32.totalorder %s99, %s100
      %p109 = scmp.eq.s32.totalorder %s26, 0
      %p110 = por %p108, %p109
      %p111 = scmp.ne.s32.totalorder %s99, %s100
      %p112 = scmp.eq.s32.totalorder %s27, 3
      %p113 = por %p111, %p112
      %p115 = scmp.ne.s32.totalorder %s100, %s114
      %p116 = scmp.eq.s32.totalorder %s27, 0
      %p117 = por %p115, %p116
      %s119 = sadd.s32 %s118, 1
      %p122 = scmp.eq.s32.totalorder %s21, 3
      %p123 = scmp.ne.s32.totalorder %s118, %s120
      %p124 = scmp.eq.s32.totalorder %s21, 0
      %p125 = por %p123, %p124
      %p126 = scmp.ne.s32.totalorder %s118, %s120
      %p127 = scmp.eq.s32.totalorder %s26, 3
      %p128 = por %p126, %p127
      %p129 = scmp.ne.s32.totalorder %s120, %s121
      %p130 = scmp.eq.s32.totalorder %s26, 0
      %p131 = por %p129, %p130
      %p132 = scmp.ne.s32.totalorder %s120, %s121
      %p133 = scmp.eq.s32.totalorder %s27, 3
      %p134 = por %p132, %p133
      %p136 = scmp.ne.s32.totalorder %s121, %s135
      %p137 = scmp.eq.s32.totalorder %s27, 0
      %p138 = por %p136, %p137
      %s140 = sadd.s32 %s139, 1
      %p143 = scmp.eq.s32.totalorder %s21, 3
      %p144 = scmp.ne.s32.totalorder %s139, %s141
      %p145 = scmp.eq.s32.totalorder %s21, 0
      %p146 = por %p144, %p145
      %p147 = scmp.ne.s32.totalorder %s139, %s141
      %p148 = scmp.eq.s32.totalorder %s26, 3
      %p149 = por %p147, %p148
      %p150 = scmp.ne.s32.totalorder %s141, %s142
      %p151 = scmp.eq.s32.totalorder %s26, 0
      %p152 = por %p150, %p151
      %p153 = scmp.ne.s32.totalorder %s141, %s142
      %p154 = scmp.eq.s32.totalorder %s27, 3
      %p155 = por %p153, %p154
      %p157 = scmp.ne.s32.totalorder %s142, %s156
      %p158 = scmp.eq.s32.totalorder %s27, 0
      %p159 = por %p157, %p158
      %s161 = sadd.s32 %s160, 1
      %p164 = scmp.eq.s32.totalorder %s21, 3
      %p165 = scmp.ne.s32.totalorder %s160, %s162
      %p166 = scmp.eq.s32.totalorder %s21, 0
      %p167 = por %p165, %p166
      %p168 = scmp.ne.s32.totalorder %s160, %s162
      %p169 = scmp.eq.s32.totalorder %s26, 3
      %p170 = por %p168, %p169
      %p171 = scmp.ne.s32.totalorder %s162, %s163
      %p172 = scmp.eq.s32.totalorder %s26, 0
      %p173 = por %p171, %p172
      %p174 = scmp.ne.s32.totalorder %s162, %s163
      %p175 = scmp.eq.s32.totalorder %s27, 3
      %p176 = por %p174, %p175
      %p178 = scmp.ne.s32.totalorder %s163, %s177
      %p179 = scmp.eq.s32.totalorder %s27, 0
      %p180 = por %p178, %p179
      %s181 = ssub.s32 %s21, %s28
      %p182 = scmp.eq.s32.totalorder %s181, 0
      %s184 = sadd.s32 %s183, 1
      %s185 = scalar_select %p182, %s183, %s184
      %p188 = pneg %p182
      %p189 = scmp.eq.s32.totalorder %s21, 3
      %p190 = por %p188, %p189
      %p191 = scmp.ne.s32.totalorder %s183, %s186
      %p192 = scmp.eq.s32.totalorder %s21, 0
      %p193 = por %p191, %p192
      %p194 = scmp.ne.s32.totalorder %s183, %s186
      %p195 = scmp.eq.s32.totalorder %s26, 3
      %p196 = por %p194, %p195
      %p197 = scmp.ne.s32.totalorder %s186, %s187
      %p198 = scmp.eq.s32.totalorder %s26, 0
      %p199 = por %p197, %p198
      %p200 = scmp.ne.s32.totalorder %s186, %s187
      %p201 = scmp.eq.s32.totalorder %s27, 3
      %p202 = por %p200, %p201
      %p204 = scmp.ne.s32.totalorder %s187, %s203
      %p205 = scmp.eq.s32.totalorder %s27, 0
      %p206 = por %p204, %p205
      %p207 = scmp.le.s32.totalorder 1, %s21
      %p208 = scmp.lt.s32.totalorder %s21, 5
      %p209 = pnand %p207, %p208
      %p210 = pneg %p209
      // Predicated region
      $region9: #{tpu_custom_call.1} parent=5 // pred_check
        _
      $region10: #{tpu_custom_call.1} parent=5 // pred_check_branch
        %212 = sbr.rel (%p209) target = $region12
      $region11: #{tpu_custom_call.1} parent=5 // pred_region
        %s213 = ssub.s32 %s21, 1
        // Predicated region
        $region13: #{tpu_custom_call.1} parent=11 // pred_check
          %p214 = pneg %p68
        $region14: #{tpu_custom_call.1} parent=11 // pred_check_branch
          %216 = sbr.rel (%p214) target = $region16
        $region15: #{tpu_custom_call.1} parent=11 // pred_region
          %218 = vsyncadd [#allocation6], 0
          %s219 = sshll.u32 %s1, 4
          %s220 = int_to_ptr.hbm [resolvable:$true] %s219
          %s221 = sshll.u32 [#allocation5], 4
          %s222 = int_to_ptr.vmem [resolvable:$true] %s221
          %227 = dma.hbm_to_vmem [thread:$0]  %s220, 2048, %s222, [#allocation6], 128, 128, 8
        $region16: #{tpu_custom_call.1} parent=11 // pred_fallthru
          _
        // Predicated region
        $region17: #{tpu_custom_call.1} parent=11 // pred_check
          %p228 = pneg %p89
        $region18: #{tpu_custom_call.1} parent=11 // pred_check_branch
          %230 = sbr.rel (%p228) target = $region20
        $region19: #{tpu_custom_call.1} parent=11 // pred_region
          _
        $region20: #{tpu_custom_call.1} parent=11 // pred_fallthru
          _
        // Predicated region
        $region21: #{tpu_custom_call.1} parent=11 // pred_check
          %p231 = pneg %p110
        $region22: #{tpu_custom_call.1} parent=11 // pred_check_branch
          %233 = sbr.rel (%p231) target = $region24
        $region23: #{tpu_custom_call.1} parent=11 // pred_region
          %235 = vsyncadd [#allocation6], 0
          %s236 = sshll.u32 %s3, 4
          %s237 = int_to_ptr.hbm [resolvable:$true] %s236
          %s238 = sshll.u32 [#allocation7], 4
          %s239 = int_to_ptr.vmem [resolvable:$true] %s238
          %244 = dma.hbm_to_vmem [thread:$0]  %s237, 2048, %s239, [#allocation6], 128, 128, 8
        $region24: #{tpu_custom_call.1} parent=11 // pred_fallthru
          _
        // Predicated region
        $region25: #{tpu_custom_call.1} parent=11 // pred_check
          %p245 = pneg %p131
        $region26: #{tpu_custom_call.1} parent=11 // pred_check_branch
          %247 = sbr.rel (%p245) target = $region28
        $region27: #{tpu_custom_call.1} parent=11 // pred_region
          _
        $region28: #{tpu_custom_call.1} parent=11 // pred_fallthru
          _
        // Predicated region
        $region29: #{tpu_custom_call.1} parent=11 // pred_check
          %p248 = pneg %p152
        $region30: #{tpu_custom_call.1} parent=11 // pred_check_branch
          %250 = sbr.rel (%p248) target = $region32
        $region31: #{tpu_custom_call.1} parent=11 // pred_region
          %252 = vsyncadd [#allocation9], 0
          %s253 = sshll.u32 %s5, 4
          %s254 = int_to_ptr.hbm [resolvable:$true] %s253
          %s255 = sshll.u32 [#allocation8], 4
          %s256 = int_to_ptr.vmem [resolvable:$true] %s255
          %261 = dma.hbm_to_vmem [thread:$0]  %s254, 2048, %s256, [#allocation9], 128, 128, 8
        $region32: #{tpu_custom_call.1} parent=11 // pred_fallthru
          _
        // Predicated region
        $region33: #{tpu_custom_call.1} parent=11 // pred_check
          %p262 = pneg %p173
        $region34: #{tpu_custom_call.1} parent=11 // pred_check_branch
          %264 = sbr.rel (%p262) target = $region36
        $region35: #{tpu_custom_call.1} parent=11 // pred_region
          _
        $region36: #{tpu_custom_call.1} parent=11 // pred_fallthru
          _
      $region12: #{tpu_custom_call.1} parent=5 // pred_fallthru
        _
      %p265 = scmp.lt.s32.totalorder %s21, 4
      // Predicated region
      $region37: #{tpu_custom_call.1} parent=5 // pred_check
        %p266 = pneg %p265
      $region38: #{tpu_custom_call.1} parent=5 // pred_check_branch
        %268 = sbr.rel (%p266) target = $region40
      $region39: #{tpu_custom_call.1} parent=5 // pred_region
        // Predicated region
        $region41: #{tpu_custom_call.1} parent=39 // pred_check
          %p269 = pneg %p41
        $region42: #{tpu_custom_call.1} parent=39 // pred_check_branch
          %271 = sbr.rel (%p269) target = $region44
        $region43: #{tpu_custom_call.1} parent=39 // pred_region
          %s272 = sand.u32 %s31, 1
          %s273 = scalar_lea.sflag [#allocation3], %s272
          %s274 = sand.u32 %s31, 1
          %s275 = smul.addr %s274, 64
          %s276 = scalar_lea.vmem [#allocation2], %s275
          %s277 = smul.u32 8, %s21
          %279 = vsyncadd %s273, 0
          %s280 = smul.addr %s277, 8
          %s281 = scalar_lea.hbm %s0, %s280
          %s282 = sshll.u32 %s281, 4
          %s283 = int_to_ptr.hbm [resolvable:$true] %s282
          %s284 = sshll.u32 %s276, 4
          %s285 = int_to_ptr.vmem [resolvable:$true] %s284
          %290 = dma.hbm_to_vmem [thread:$0]  %s283, 1024, %s285, %s273, 128, 128, 8
        $region44: #{tpu_custom_call.1} parent=39 // pred_fallthru
          _
      $region40: #{tpu_custom_call.1} parent=5 // pred_fallthru
        _
      %p291 = scmp.le.s32.totalorder 1, %s21
      %p292 = scmp.lt.s32.totalorder %s21, 5
      %p293 = pnand %p291, %p292
      %p294 = pneg %p293
      // Predicated region
      $region45: #{tpu_custom_call.1} parent=5 // pred_check
        _
      $region46: #{tpu_custom_call.1} parent=5 // pred_check_branch
        %296 = sbr.rel (%p293) target = $region48
      $region47: #{tpu_custom_call.1} parent=5 // pred_region
        %s297 = ssub.s32 %s21, 1
        %s298 = sand.u32 %s34, 1
        %s299 = scalar_lea.sflag [#allocation3], %s298
        %s300 = sand.u32 %s34, 1
        %s301 = smul.addr %s300, 64
        %s302 = scalar_lea.vmem [#allocation2], %s301
        // Predicated region
        $region49: #{tpu_custom_call.1} parent=47 // pred_check
          %p303 = pneg %p47
        $region50: #{tpu_custom_call.1} parent=47 // pred_check_branch
          %305 = sbr.rel (%p303) target = $region52
        $region51: #{tpu_custom_call.1} parent=47 // pred_region
          %307 = dma.done %s299, 1024
        $region52: #{tpu_custom_call.1} parent=47 // pred_fallthru
          _
        // Predicated region
        $region53: #{tpu_custom_call.1} parent=47 // pred_check
          %p308 = pneg %p68
        $region54: #{tpu_custom_call.1} parent=47 // pred_check_branch
          %310 = sbr.rel (%p308) target = $region56
        $region55: #{tpu_custom_call.1} parent=47 // pred_region
          %312 = dma.done [#allocation6], 2048
        $region56: #{tpu_custom_call.1} parent=47 // pred_fallthru
          _
        // Predicated region
        $region57: #{tpu_custom_call.1} parent=47 // pred_check
          %p313 = pneg %p110
        $region58: #{tpu_custom_call.1} parent=47 // pred_check_branch
          %315 = sbr.rel (%p313) target = $region60
        $region59: #{tpu_custom_call.1} parent=47 // pred_region
          %317 = dma.done [#allocation6], 2048
        $region60: #{tpu_custom_call.1} parent=47 // pred_fallthru
          _
        // Predicated region
        $region61: #{tpu_custom_call.1} parent=47 // pred_check
          %p318 = pneg %p152
        $region62: #{tpu_custom_call.1} parent=47 // pred_check_branch
          %320 = sbr.rel (%p318) target = $region64
        $region63: #{tpu_custom_call.1} parent=47 // pred_region
          %322 = dma.done [#allocation9], 2048
        $region64: #{tpu_custom_call.1} parent=47 // pred_fallthru
          _
        %s323 = sand.u32 %s34, 1
        %s324 = scalar_lea.sflag [#allocation3], %s323
        %s325 = sand.u32 %s34, 1
        %s326 = smul.addr %s325, 64
        %s327 = scalar_lea.vmem [#allocation2], %s326
        %p328 = pneg %p47
        %p329 = pneg %p44
        %p330 = pneg %p68
        %p331 = pneg %p65
        %p332 = pneg %p89
        %p333 = pneg %p86
        %p334 = pneg %p110
        %p335 = pneg %p107
        %p336 = pneg %p131
        %p337 = pneg %p128
        %p338 = pneg %p152
        %p339 = pneg %p149
        %p340 = pneg %p173
        %p341 = pneg %p170
        %p342 = pneg %p199
        %p343 = pneg %p196
        %s344 = sand.u32 %s186, 1
        %s345 = scalar_lea.sflag [#allocation4], %s344
        %s346 = sand.u32 %s186, 1
        %s347 = smul.addr %s346, 64
        %s348 = scalar_lea.vmem [#allocation10], %s347
        %s349 = smul.u32 8, %s26
        %s350 = smul.u32 8, %s26
        %v351 = vld [vmem:[%s302] sm:$0xff]
        %v352 = vld [vmem:[%s302 + $0x8] sm:$0xff]
        %v353 = vld [vmem:[%s302 + $0x10] sm:$0xff]
        %v354 = vld [vmem:[%s302 + $0x18] sm:$0xff]
        %v355 = vld [vmem:[%s302 + $0x20] sm:$0xff]
        %v356 = vld [vmem:[%s302 + $0x28] sm:$0xff]
        %v357 = vld [vmem:[%s302 + $0x30] sm:$0xff]
        %v358 = vld [vmem:[%s302 + $0x38] sm:$0xff]
        %v359 = vld [vmem:[#allocation5] sm:$0xff]
        %v360 = vld [vmem:[#allocation5 + $0x8] sm:$0xff]
        %v361 = vld [vmem:[#allocation5 + $0x10] sm:$0xff]
        %v362 = vld [vmem:[#allocation5 + $0x18] sm:$0xff]
        %v363 = vld [vmem:[#allocation5 + $0x20] sm:$0xff]
        %v364 = vld [vmem:[#allocation5 + $0x28] sm:$0xff]
        %v365 = vld [vmem:[#allocation5 + $0x30] sm:$0xff]
        %v366 = vld [vmem:[#allocation5 + $0x38] sm:$0xff]
        %v367 = vld [vmem:[#allocation5 + $0x40] sm:$0xff]
        %v368 = vld [vmem:[#allocation5 + $0x48] sm:$0xff]
        %v369 = vld [vmem:[#allocation5 + $0x50] sm:$0xff]
        %v370 = vld [vmem:[#allocation5 + $0x58] sm:$0xff]
        %v371 = vld [vmem:[#allocation5 + $0x60] sm:$0xff]
        %v372 = vld [vmem:[#allocation5 + $0x68] sm:$0xff]
        %v373 = vld [vmem:[#allocation5 + $0x70] sm:$0xff]
        %v374 = vld [vmem:[#allocation5 + $0x78] sm:$0xff]
        %v375 = vld [vmem:[%s2] sm:$0x1]
        %v377 = vperm.slane %v375, 0
        %379 = vmatpush.msra.mxu0 %v374
        %380 = vmatpush.msra.mxu0 %v373
        %381 = vmatpush.msra.mxu0 %v372
        %382 = vmatpush.msra.mxu0 %v371
        %383 = vmatpush.msra.mxu0 %v370
        %384 = vmatpush.msra.mxu0 %v369
        %385 = vmatpush.msra.mxu0 %v368
        %386 = vmatpush.msra.mxu0 %v367
        %387 = vmatpush.msra.mxu0 %v366
        %388 = vmatpush.msra.mxu0 %v365
        %389 = vmatpush.msra.mxu0 %v364
        %390 = vmatpush.msra.mxu0 %v363
        %391 = vmatpush.msra.mxu0 %v362
        %392 = vmatpush.msra.mxu0 %v361
        %393 = vmatpush.msra.mxu0 %v360
        %394 = vmatpush.msra.mxu0 %v359
        %395 = vmatmul.f32.gmra.mxu0 %v351
        %v396 = vpop.f32.mrf.mxu0
        %v397 = vadd.f32 %v377, %v396
        %398 = vmatmul.f32.gmra.mxu0 %v352
        %v399 = vpop.f32.mrf.mxu0
        %v400 = vadd.f32 %v377, %v399
        %401 = vmatmul.f32.gmra.mxu0 %v353
        %v402 = vpop.f32.mrf.mxu0
        %v403 = vadd.f32 %v377, %v402
        %404 = vmatmul.f32.gmra.mxu0 %v354
        %v405 = vpop.f32.mrf.mxu0
        %v406 = vadd.f32 %v377, %v405
        %407 = vmatmul.f32.gmra.mxu0 %v355
        %v408 = vpop.f32.mrf.mxu0
        %v409 = vadd.f32 %v377, %v408
        %410 = vmatmul.f32.gmra.mxu0 %v356
        %v411 = vpop.f32.mrf.mxu0
        %v412 = vadd.f32 %v377, %v411
        %413 = vmatmul.f32.gmra.mxu0 %v357
        %v414 = vpop.f32.mrf.mxu0
        %v415 = vadd.f32 %v377, %v414
        %416 = vmatmul.f32.gmra.mxu0 %v358
        %v417 = vpop.f32.mrf.mxu0
        %v418 = vadd.f32 %v377, %v417
        %419 = vdwg.mxu0
        %v420 = vmax.f32 %v397, 0.0
        %v421 = vmax.f32 %v400, 0.0
        %v422 = vmax.f32 %v403, 0.0
        %v423 = vmax.f32 %v406, 0.0
        %v424 = vmax.f32 %v409, 0.0
        %v425 = vmax.f32 %v412, 0.0
        %v426 = vmax.f32 %v415, 0.0
        %v427 = vmax.f32 %v418, 0.0
        %v428 = vld [vmem:[#allocation7] sm:$0xff]
        %v429 = vld [vmem:[#allocation7 + $0x8] sm:$0xff]
        %v430 = vld [vmem:[#allocation7 + $0x10] sm:$0xff]
        %v431 = vld [vmem:[#allocation7 + $0x18] sm:$0xff]
        %v432 = vld [vmem:[#allocation7 + $0x20] sm:$0xff]
        %v433 = vld [vmem:[#allocation7 + $0x28] sm:$0xff]
        %v434 = vld [vmem:[#allocation7 + $0x30] sm:$0xff]
        %v435 = vld [vmem:[#allocation7 + $0x38] sm:$0xff]
        %v436 = vld [vmem:[#allocation7 + $0x40] sm:$0xff]
        %v437 = vld [vmem:[#allocation7 + $0x48] sm:$0xff]
        %v438 = vld [vmem:[#allocation7 + $0x50] sm:$0xff]
        %v439 = vld [vmem:[#allocation7 + $0x58] sm:$0xff]
        %v440 = vld [vmem:[#allocation7 + $0x60] sm:$0xff]
        %v441 = vld [vmem:[#allocation7 + $0x68] sm:$0xff]
        %v442 = vld [vmem:[#allocation7 + $0x70] sm:$0xff]
        %v443 = vld [vmem:[#allocation7 + $0x78] sm:$0xff]
        %v444 = vld [vmem:[%s4] sm:$0x1]
        %v446 = vperm.slane %v444, 0
        %448 = vmatpush.msra.mxu0 %v443
        %449 = vmatpush.msra.mxu0 %v442
        %450 = vmatpush.msra.mxu0 %v441
        %451 = vmatpush.msra.mxu0 %v440
        %452 = vmatpush.msra.mxu0 %v439
        %453 = vmatpush.msra.mxu0 %v438
        %454 = vmatpush.msra.mxu0 %v437
        %455 = vmatpush.msra.mxu0 %v436
        %456 = vmatpush.msra.mxu0 %v435
        %457 = vmatpush.msra.mxu0 %v434
        %458 = vmatpush.msra.mxu0 %v433
        %459 = vmatpush.msra.mxu0 %v432
        %460 = vmatpush.msra.mxu0 %v431
        %461 = vmatpush.msra.mxu0 %v430
        %462 = vmatpush.msra.mxu0 %v429
        %463 = vmatpush.msra.mxu0 %v428
        %464 = vmatmul.f32.gmra.mxu0 %v420
        %v465 = vpop.f32.mrf.mxu0
        %v466 = vadd.f32 %v446, %v465
        %467 = vmatmul.f32.gmra.mxu0 %v421
        %v468 = vpop.f32.mrf.mxu0
        %v469 = vadd.f32 %v446, %v468
        %470 = vmatmul.f32.gmra.mxu0 %v422
        %v471 = vpop.f32.mrf.mxu0
        %v472 = vadd.f32 %v446, %v471
        %473 = vmatmul.f32.gmra.mxu0 %v423
        %v474 = vpop.f32.mrf.mxu0
        %v475 = vadd.f32 %v446, %v474
        %476 = vmatmul.f32.gmra.mxu0 %v424
        %v477 = vpop.f32.mrf.mxu0
        %v478 = vadd.f32 %v446, %v477
        %479 = vmatmul.f32.gmra.mxu0 %v425
        %v480 = vpop.f32.mrf.mxu0
        %v481 = vadd.f32 %v446, %v480
        %482 = vmatmul.f32.gmra.mxu0 %v426
        %v483 = vpop.f32.mrf.mxu0
        %v484 = vadd.f32 %v446, %v483
        %485 = vmatmul.f32.gmra.mxu0 %v427
        %v486 = vpop.f32.mrf.mxu0
        %v487 = vadd.f32 %v446, %v486
        %488 = vdwg.mxu0
        %v489 = vmax.f32 %v466, 0.0
        %v490 = vmax.f32 %v469, 0.0
        %v491 = vmax.f32 %v472, 0.0
        %v492 = vmax.f32 %v475, 0.0
        %v493 = vmax.f32 %v478, 0.0
        %v494 = vmax.f32 %v481, 0.0
        %v495 = vmax.f32 %v484, 0.0
        %v496 = vmax.f32 %v487, 0.0
        %v497 = vld [vmem:[#allocation8] sm:$0xff]
        %v498 = vld [vmem:[#allocation8 + $0x8] sm:$0xff]
        %v499 = vld [vmem:[#allocation8 + $0x10] sm:$0xff]
        %v500 = vld [vmem:[#allocation8 + $0x18] sm:$0xff]
        %v501 = vld [vmem:[#allocation8 + $0x20] sm:$0xff]
        %v502 = vld [vmem:[#allocation8 + $0x28] sm:$0xff]
        %v503 = vld [vmem:[#allocation8 + $0x30] sm:$0xff]
        %v504 = vld [vmem:[#allocation8 + $0x38] sm:$0xff]
        %v505 = vld [vmem:[#allocation8 + $0x40] sm:$0xff]
        %v506 = vld [vmem:[#allocation8 + $0x48] sm:$0xff]
        %v507 = vld [vmem:[#allocation8 + $0x50] sm:$0xff]
        %v508 = vld [vmem:[#allocation8 + $0x58] sm:$0xff]
        %v509 = vld [vmem:[#allocation8 + $0x60] sm:$0xff]
        %v510 = vld [vmem:[#allocation8 + $0x68] sm:$0xff]
        %v511 = vld [vmem:[#allocation8 + $0x70] sm:$0xff]
        %v512 = vld [vmem:[#allocation8 + $0x78] sm:$0xff]
        %v513 = vld [vmem:[%s6] sm:$0x1]
        %v515 = vperm.slane %v513, 0
        %517 = vmatpush.msra.mxu0 %v512
        %518 = vmatpush.msra.mxu0 %v511
        %519 = vmatpush.msra.mxu0 %v510
        %520 = vmatpush.msra.mxu0 %v509
        %521 = vmatpush.msra.mxu0 %v508
        %522 = vmatpush.msra.mxu0 %v507
        %523 = vmatpush.msra.mxu0 %v506
        %524 = vmatpush.msra.mxu0 %v505
        %525 = vmatpush.msra.mxu0 %v504
        %526 = vmatpush.msra.mxu0 %v503
        %527 = vmatpush.msra.mxu0 %v502
        %528 = vmatpush.msra.mxu0 %v501
        %529 = vmatpush.msra.mxu0 %v500
        %530 = vmatpush.msra.mxu0 %v499
        %531 = vmatpush.msra.mxu0 %v498
        %532 = vmatpush.msra.mxu0 %v497
        %533 = vmatmul.f32.gmra.mxu0 %v489
        %v534 = vpop.f32.mrf.mxu0
        %v535 = vadd.f32 %v515, %v534
        %536 = vmatmul.f32.gmra.mxu0 %v490
        %v537 = vpop.f32.mrf.mxu0
        %v538 = vadd.f32 %v515, %v537
        %539 = vmatmul.f32.gmra.mxu0 %v491
        %v540 = vpop.f32.mrf.mxu0
        %v541 = vadd.f32 %v515, %v540
        %542 = vmatmul.f32.gmra.mxu0 %v492
        %v543 = vpop.f32.mrf.mxu0
        %v544 = vadd.f32 %v515, %v543
        %545 = vmatmul.f32.gmra.mxu0 %v493
        %v546 = vpop.f32.mrf.mxu0
        %v547 = vadd.f32 %v515, %v546
        %548 = vmatmul.f32.gmra.mxu0 %v494
        %v549 = vpop.f32.mrf.mxu0
        %v550 = vadd.f32 %v515, %v549
        %551 = vmatmul.f32.gmra.mxu0 %v495
        %v552 = vpop.f32.mrf.mxu0
        %v553 = vadd.f32 %v515, %v552
        %554 = vmatmul.f32.gmra.mxu0 %v496
        %v555 = vpop.f32.mrf.mxu0
        %v556 = vadd.f32 %v515, %v555
        %557 = vdwg.mxu0
        %558 = vst [vmem:[%s348] sm:$0xff] %v535
        %559 = vst [vmem:[%s348 + $0x8] sm:$0xff] %v538
        %560 = vst [vmem:[%s348 + $0x10] sm:$0xff] %v541
        %561 = vst [vmem:[%s348 + $0x18] sm:$0xff] %v544
        %562 = vst [vmem:[%s348 + $0x20] sm:$0xff] %v547
        %563 = vst [vmem:[%s348 + $0x28] sm:$0xff] %v550
        %564 = vst [vmem:[%s348 + $0x30] sm:$0xff] %v553
        %565 = vst [vmem:[%s348 + $0x38] sm:$0xff] %v556
        %s566 = sand.u32 %s186, 1
        %s567 = scalar_lea.sflag [#allocation4], %s566
        %s568 = sand.u32 %s186, 1
        %s569 = smul.addr %s568, 64
        %s570 = scalar_lea.vmem [#allocation10], %s569
        // Predicated region
        $region65: #{tpu_custom_call.1} parent=47 // pred_check
          %p571 = pneg %p196
        $region66: #{tpu_custom_call.1} parent=47 // pred_check_branch
          %573 = sbr.rel (%p571) target = $region68
        $region67: #{tpu_custom_call.1} parent=47 // pred_region
          %s574 = smul.u32 8, %s26
          %576 = vsyncadd %s567, 0
          %s577 = smul.addr %s574, 8
          %s578 = scalar_lea.hbm %s7, %s577
          %s579 = sshll.u32 %s570, 4
          %s580 = int_to_ptr.vmem [resolvable:$true] %s579
          %s581 = sshll.u32 %s578, 4
          %s582 = int_to_ptr.hbm [resolvable:$true] %s581
          %587 = dma.vmem_to_hbm [thread:$0]  %s580, 1024, %s582, %s567, 128, 128, 8
        $region68: #{tpu_custom_call.1} parent=47 // pred_fallthru
          _
      $region48: #{tpu_custom_call.1} parent=5 // pred_fallthru
        _
      %p588 = scmp.le.s32.totalorder 2, %s21
      // Predicated region
      $region69: #{tpu_custom_call.1} parent=5 // pred_check
        %p589 = pneg %p588
      $region70: #{tpu_custom_call.1} parent=5 // pred_check_branch
        %591 = sbr.rel (%p589) target = $region72
      $region71: #{tpu_custom_call.1} parent=5 // pred_region
        %s592 = ssub.s32 %s21, 2
        // Predicated region
        $region73: #{tpu_custom_call.1} parent=71 // pred_check
          %p593 = pneg %p202
        $region74: #{tpu_custom_call.1} parent=71 // pred_check_branch
          %595 = sbr.rel (%p593) target = $region76
        $region75: #{tpu_custom_call.1} parent=71 // pred_region
          %s596 = sand.u32 %s187, 1
          %s597 = scalar_lea.sflag [#allocation4], %s596
          %s598 = sand.u32 %s187, 1
          %s599 = smul.addr %s598, 64
          %s600 = scalar_lea.vmem [#allocation10], %s599
          %602 = dma.done %s597, 1024
        $region76: #{tpu_custom_call.1} parent=71 // pred_fallthru
          _
      $region72: #{tpu_custom_call.1} parent=5 // pred_fallthru
        _
    $region6: #{tpu_custom_call.1} parent=1 // loop_footer
      %s25 = sadd.s32 1, %s21
    $region7: #{tpu_custom_call.1} parent=1 // loop_footer_branch
      %20 = sbr.rel target = $region3
    $region8: #{tpu_custom_call.1} parent=1 // loop_exit
      _
    %603 = vsyncpa [#allocation3], 1
    %s604 = scalar_lea.sflag [#allocation3], 1
    %605 = vsyncpa %s604, 1
    %606 = vsyncpa [#allocation6], 1
    %607 = vsyncpa [#allocation9], 1
    %608 = vsyncpa [#allocation4], 1
    %s609 = scalar_lea.sflag [#allocation4], 1
    %610 = vsyncpa %s609, 1

</llo_original>
